<compile_context>
chip_gen: v6e
topology: v6e:2x2x1
jax: 0.10.0
libtpu: 0.0.40
codegen_flags: <defaults>
</compile_context>

<pallas_src>
import functools

import jax
import jax.numpy as jnp
from jax import lax
from jax.experimental import pallas as pl
from jax.experimental.pallas import tpu as pltpu

_LANE = 128


def _round_up(x, m):
    return ((x + m - 1) // m) * m


def _hw_config():
    """Generation-dependent knobs: row shards (megacore) and VMEM budgets."""
    is_v7x = False
    try:
        kind = jax.devices()[0].device_kind.lower()
        is_v7x = "7" in kind
    except Exception:
        pass
    if not is_v7x:
        try:
            info = pltpu.get_tpu_info()
            vmem = getattr(info, "vmem_capacity_bytes", None)
            if vmem is not None and int(vmem) <= 64 * 1024 * 1024:
                is_v7x = True  # 64 MiB per TC is the v7x signature
        except Exception:
            pass
    if is_v7x:
        # v7x: 64 MiB VMEM per TensorCore, 2 TCs -> conservative budget, shard
        # the batch across the two cores.
        return dict(num_shards=2,
                    vmem_limit=32 * 1024 * 1024,
                    vmem_cap=56 * 1024 * 1024,
                    work_budget=20 * 1024 * 1024)
    # v5e / v6e: single TensorCore, 128 MiB physical VMEM.
    return dict(num_shards=1,
                vmem_limit=64 * 1024 * 1024,
                vmem_cap=100 * 1024 * 1024,
                work_budget=40 * 1024 * 1024)


def _choose_tile(n, c, buffer_bytes_per_elem, sublane, cfg):
    """Row-tile size from the VMEM budget (no hard cap)."""
    c_lanes = _round_up(c, _LANE)
    # Per tile row: 2 inputs x 2 pipeline buffers in the HBM dtype plus
    # ~5 live f32 (tile_n, C) temporaries inside the kernel.
    bytes_per_row = c_lanes * (buffer_bytes_per_elem + 5 * 4)
    fit_rows = cfg["work_budget"] // bytes_per_row
    if fit_rows < sublane:
        # TODO(synk): vocab-scale C needs a second "arbitrary" grid axis over C
        # with an online (flash-style) logsumexp; until then run the minimum
        # row tile and raise the scoped-VMEM limit so it still compiles.
        cfg["vmem_limit"] = min(cfg["vmem_cap"],
                                max(cfg["vmem_limit"],
                                    sublane * bytes_per_row + (8 << 20)))
    tile_cap = max(sublane, (fit_rows // sublane) * sublane)

    if n < sublane:
        # One full-height block (allowed: block dim equals the full array dim).
        return n, 1, 1

    num_shards = cfg["num_shards"]
    rows_per_shard = -(-n // num_shards)
    # tile_n never exceeds n (so block_shape[0] <= array rows) and is a
    # sublane multiple.
    tile_n = min(tile_cap,
                 _round_up(rows_per_shard, sublane),
                 (n // sublane) * sublane)
    if num_shards > 1 and rows_per_shard >= 2 * sublane:
        # v7x: keep >= 2 row tiles per TensorCore so the input double-buffer
        # actually overlaps DMA with compute on each core.
        tile_n = min(tile_n, _round_up(-(-rows_per_shard // 2), sublane))
    tiles_per_shard = -(-rows_per_shard // tile_n)
    return tile_n, tiles_per_shard, num_shards


def _distill_kl_kernel(s_ref, t_ref, out_ref, acc_ref, *, temperature, n_valid,
                       tiles_per_shard, tile_n, need_row_mask):
    """Accumulates per-row KL into a VMEM scratch; reduces once per shard.

    The output block index depends only on grid axis 0 (the row shard), so it
    stays resident in VMEM across grid axis 1 (the reduction over row tiles)
    and is written exactly once, on the last step.
    """
    step = pl.program_id(1)

    @pl.when(step == 0)
    def _init():
        acc_ref[...] = jnp.zeros_like(acc_ref)

    inv_temp = 1.0 / temperature
    s = s_ref[...].astype(jnp.float32) * inv_temp
    t = t_ref[...].astype(jnp.float32) * inv_temp

    # Student: only the shifted logits and the per-row LSE are needed
    # (log_softmax is never materialised).
    s_shift = s - jnp.max(s, axis=1, keepdims=True)
    s_lse = jnp.log(jnp.sum(jnp.exp(s_shift), axis=1, keepdims=True))

    # Teacher softmax kept unnormalised; using sum_j p_t = 1 folds the
    # normalisation and log(p_t) into per-row scalars:
    #   KL_row = (1/t_sum) * sum_j t_exp_j*(t_shift_j - s_shift_j)
    #            + s_lse - log(t_sum)
    t_shift = t - jnp.max(t, axis=1, keepdims=True)
    t_exp = jnp.exp(t_shift)
    t_sum = jnp.sum(t_exp, axis=1, keepdims=True)

    row_inner = jnp.sum(t_exp * (t_shift - s_shift), axis=1, keepdims=True)
    inv_t_sum = pl.reciprocal(t_sum, approx=False)  # per-row only
    kl_rows = row_inner * inv_t_sum + s_lse - jnp.log(t_sum)

    if need_row_mask:
        # Zero rows past the valid batch (ragged last tile / clamped duplicate
        # tiles).  Garbage in those rows is row-local and selected away here.
        row0 = (pl.program_id(0) * tiles_per_shard + step) * tile_n
        row_ids = lax.broadcasted_iota(jnp.int32, kl_rows.shape, 0) + row0
        kl_rows = jnp.where(row_ids < n_valid, kl_rows, 0.0)

    # Per-row accumulate every step; the cross-row reduce is deferred.
    acc_ref[...] += kl_rows

    @pl.when(step == pl.num_programs(1) - 1)
    def _finalize():
        # Broadcast the shard's scalar partial sum to the whole (8,128) block
        # (lane-dense, unmasked store).  The wrapper reads element [0, 0] of
        # each shard block — every element holds the same value by design.
        out_ref[...] = jnp.zeros_like(out_ref) + jnp.sum(acc_ref[...])


def distill_kl_pallas(feat_student, feat_teacher, temperature=4.0,
                      loss_weight=1.0):
    """DistillKL.forward: returns {'KLloss': scalar}."""
    assert feat_student.shape == feat_teacher.shape
    assert feat_student.ndim == 2, "expects (N, C) logits (softmax over dim=1)"
    n, c = feat_student.shape

    item_s = jnp.dtype(feat_student.dtype).itemsize
    item_t = jnp.dtype(feat_teacher.dtype).itemsize
    sublane = max(8, 32 // max(min(item_s, item_t), 1))  # 8 for f32, 16 for bf16

    cfg = _hw_config()
    tile_n, tiles_per_shard, num_shards = _choose_tile(
        n, c, 2 * (item_s + item_t), sublane, cfg)

    last_block = -(-n // tile_n) - 1  # last row tile that touches valid rows
    need_row_mask = (num_shards * tiles_per_shard * tile_n != n)

    kernel = functools.partial(
        _distill_kl_kernel,
        temperature=float(temperature),
        n_valid=n,
        tiles_per_shard=tiles_per_shard,
        tile_n=tile_n,
        need_row_mask=need_row_mask,
    )

    # No HBM padding: the class axis is full-width in every block; row tiles
    # past the end of the batch are clamped to the last in-bounds block and
    # zeroed by the row mask inside the kernel.
    def in_map(shard, i):
        return (jnp.minimum(shard * tiles_per_shard + i, last_block), 0)

    out_map = lambda shard, i: (shard, 0)

    c_lanes = _round_up(c, _LANE)
    cost = pl.CostEstimate(
        flops=int(9 * n * c_lanes),
        transcendentals=int(2 * n * c_lanes + 4 * n),
        bytes_accessed=int(n * c * (item_s + item_t) + num_shards * 8 * _LANE * 4),
    )

    partials = pl.pallas_call(
        kernel,
        out_shape=jax.ShapeDtypeStruct((num_shards * 8, _LANE), jnp.float32),
        grid=(num_shards, tiles_per_shard),
        in_specs=[
            pl.BlockSpec((tile_n, c), in_map),
            pl.BlockSpec((tile_n, c), in_map),
        ],
        out_specs=pl.BlockSpec((8, _LANE), out_map),
        scratch_shapes=[pltpu.VMEM((tile_n, 1), jnp.float32)],
        compiler_params=pltpu.CompilerParams(
            dimension_semantics=("parallel", "arbitrary"),
            vmem_limit_bytes=int(cfg["vmem_limit"]),
        ),
        cost_estimate=cost,
    )(feat_student, feat_teacher)

    # Invariant: each shard's (8,128) block holds its partial KL sum broadcast
    # to every element, so [shard, 0, 0] is that shard's partial sum.
    kl_sum = jnp.sum(partials.reshape(num_shards, 8, _LANE)[:, 0, 0])

    # Scale applied exactly once (T*2, not T**2 — matching the reference module).
    loss = loss_weight * kl_sum * (temperature * 2.0) / n
    return {"KLloss": loss}


def _reference(feat_student, feat_teacher, temperature, loss_weight):
    """Pure-JAX reference for sanity checking."""
    s = feat_student.astype(jnp.float32) / temperature
    t = feat_teacher.astype(jnp.float32) / temperature
    log_p_s = jax.nn.log_softmax(s, axis=1)
    p_t = jax.nn.softmax(t, axis=1)
    log_p_t = jax.nn.log_softmax(t, axis=1)
    kl = jnp.sum(p_t * (log_p_t - log_p_s))
    return loss_weight * kl * (temperature * 2.0) / feat_student.shape[0]


if __name__ == "__main__":
    key = jax.random.PRNGKey(0)
    k1, k2, k3, k4 = jax.random.split(key, 4)

    # Case 1: small classification-style logits (batch=8, classes=32), f32.
    N, C = 8, 32
    fs = jax.random.normal(k1, (N, C), dtype=jnp.float32)
    ft = jax.random.normal(k2, (N, C), dtype=jnp.float32)
    out = distill_kl_pallas(fs, ft, temperature=4.0, loss_weight=1.0)
    kl_loss = jax.block_until_ready(out["KLloss"])
    ref = _reference(fs, ft, 4.0, 1.0)
    assert jnp.allclose(kl_loss, ref, rtol=1e-4, atol=1e-5), (kl_loss, ref)

    # Case 2: bf16 logits, ragged batch (exercises the row mask / tiled grid).
    N2, C2 = 100, 384
    fs2 = jax.random.normal(k3, (N2, C2), dtype=jnp.float32).astype(jnp.bfloat16)
    ft2 = jax.random.normal(k4, (N2, C2), dtype=jnp.float32).astype(jnp.bfloat16)
    out2 = distill_kl_pallas(fs2, ft2, temperature=2.0, loss_weight=0.5)
    kl_loss2 = jax.block_until_ready(out2["KLloss"])
    ref2 = _reference(fs2, ft2, 2.0, 0.5)
    assert jnp.allclose(kl_loss2, ref2, rtol=1e-4, atol=2e-5), (kl_loss2, ref2)

    print("KERNEL_OK")
</pallas_src>

<mosaic_0001>
module attributes {stable_mosaic.version = 11 : i64} {
  func.func @_distill_kl_kernel(%arg0: i32, %arg1: i32, %arg2: memref<8x32xf32, #tpu.memory_space<vmem>>, %arg3: memref<8x32xf32, #tpu.memory_space<vmem>>, %arg4: memref<8x128xf32, #tpu.memory_space<vmem>>, %arg5: memref<8x1xf32, #tpu.memory_space<vmem>>) attributes {dimension_semantics = [#tpu.dimension_semantics<parallel>, #tpu.dimension_semantics<arbitrary>], iteration_bounds = array<i64: 1, 1>, scalar_prefetch = 0 : i64, scratch_operands = 1 : i64, tpu.core_type = #tpu.core_type<tc>, window_params = [{transform_indices = @transform_0, window_bounds = array<i64: 8, 32>}, {transform_indices = @transform_1, window_bounds = array<i64: 8, 32>}, {transform_indices = @transform_2, window_bounds = array<i64: 8, 128>}]} {
    %c0_i32 = arith.constant 0 : i32
    %0 = arith.cmpi eq, %arg1, %c0_i32 : i32
    %1 = arith.extui %0 : i1 to i32
    %c0_i32_0 = arith.constant 0 : i32
    %2 = arith.cmpi ne, %1, %c0_i32_0 : i32
    scf.if %2 {
      %cst_16 = arith.constant 0.000000e+00 : f32
      %39 = vector.broadcast %cst_16 : f32 to vector<8x1xf32>
      %c0_17 = arith.constant 0 : index
      %c0_18 = arith.constant 0 : index
      %40 = vector.load %arg5[%c0_17, %c0_18] : memref<8x1xf32, #tpu.memory_space<vmem>>, vector<8x1xf32>
      tpu.vector_store %arg5[%c0_17, %c0_18], %39 {strides = array<i32>} : memref<8x1xf32, #tpu.memory_space<vmem>>, vector<8x1xf32>,
    } else {
    }
    %c0 = arith.constant 0 : index
    %c0_1 = arith.constant 0 : index
    %3 = vector.load %arg2[%c0, %c0_1] : memref<8x32xf32, #tpu.memory_space<vmem>>, vector<8x32xf32>
    %cst = arith.constant 2.500000e-01 : f32
    %4 = vector.broadcast %cst : f32 to vector<8x32xf32>
    %5 = arith.mulf %3, %4 : vector<8x32xf32>
    %c0_2 = arith.constant 0 : index
    %c0_3 = arith.constant 0 : index
    %6 = vector.load %arg3[%c0_2, %c0_3] : memref<8x32xf32, #tpu.memory_space<vmem>>, vector<8x32xf32>
    %cst_4 = arith.constant 2.500000e-01 : f32
    %7 = vector.broadcast %cst_4 : f32 to vector<8x32xf32>
    %8 = arith.mulf %6, %7 : vector<8x32xf32>
    %cst_5 = arith.constant dense<0xFF800000> : vector<8xf32>
    %9 = vector.multi_reduction <maximumf>, %5, %cst_5 [1] : vector<8x32xf32> to vector<8xf32>
    %10 = vector.shape_cast %9 : vector<8xf32> to vector<8x1xf32>
    %11 = vector.broadcast %10 : vector<8x1xf32> to vector<8x32xf32>
    %12 = arith.subf %5, %11 : vector<8x32xf32>
    %13 = math.exp %12 : vector<8x32xf32>
    %cst_6 = arith.constant dense<0.000000e+00> : vector<8xf32>
    %14 = vector.multi_reduction <add>, %13, %cst_6 [1] : vector<8x32xf32> to vector<8xf32>
    %15 = vector.shape_cast %14 : vector<8xf32> to vector<8x1xf32>
    %16 = math.log %15 : vector<8x1xf32>
    %cst_7 = arith.constant dense<0xFF800000> : vector<8xf32>
    %17 = vector.multi_reduction <maximumf>, %8, %cst_7 [1] : vector<8x32xf32> to vector<8xf32>
    %18 = vector.shape_cast %17 : vector<8xf32> to vector<8x1xf32>
    %19 = vector.broadcast %18 : vector<8x1xf32> to vector<8x32xf32>
    %20 = arith.subf %8, %19 : vector<8x32xf32>
    %21 = math.exp %20 : vector<8x32xf32>
    %cst_8 = arith.constant dense<0.000000e+00> : vector<8xf32>
    %22 = vector.multi_reduction <add>, %21, %cst_8 [1] : vector<8x32xf32> to vector<8xf32>
    %23 = vector.shape_cast %22 : vector<8xf32> to vector<8x1xf32>
    %24 = arith.subf %20, %12 : vector<8x32xf32>
    %25 = arith.mulf %21, %24 : vector<8x32xf32>
    %cst_9 = arith.constant dense<0.000000e+00> : vector<8xf32>
    %26 = vector.multi_reduction <add>, %25, %cst_9 [1] : vector<8x32xf32> to vector<8xf32>
    %27 = vector.shape_cast %26 : vector<8xf32> to vector<8x1xf32>
    %28 = tpu.reciprocal %23 : vector<8x1xf32> -> vector<8x1xf32>
    %29 = arith.mulf %27, %28 : vector<8x1xf32>
    %30 = arith.addf %29, %16 : vector<8x1xf32>
    %31 = math.log %23 : vector<8x1xf32>
    %32 = arith.subf %30, %31 : vector<8x1xf32>
    %c0_10 = arith.constant 0 : index
    %c0_11 = arith.constant 0 : index
    %33 = vector.load %arg5[%c0_10, %c0_11] : memref<8x1xf32, #tpu.memory_space<vmem>>, vector<8x1xf32>
    %34 = arith.addf %33, %32 : vector<8x1xf32>
    %c0_12 = arith.constant 0 : index
    %c0_13 = arith.constant 0 : index
    %35 = vector.load %arg5[%c0_12, %c0_13] : memref<8x1xf32, #tpu.memory_space<vmem>>, vector<8x1xf32>
    tpu.vector_store %arg5[%c0_12, %c0_13], %34 {strides = array<i32>} : memref<8x1xf32, #tpu.memory_space<vmem>>, vector<8x1xf32>,
    %c0_i32_14 = arith.constant 0 : i32
    %36 = arith.cmpi eq, %arg1, %c0_i32_14 : i32
    %37 = arith.extui %36 : i1 to i32
    %c0_i32_15 = arith.constant 0 : i32
    %38 = arith.cmpi ne, %37, %c0_i32_15 : i32
    scf.if %38 {
      %cst_16 = arith.constant 0.000000e+00 : f32
      %39 = vector.broadcast %cst_16 : f32 to vector<8x128xf32>
      %c0_17 = arith.constant 0 : index
      %c0_18 = arith.constant 0 : index
      %40 = vector.load %arg5[%c0_17, %c0_18] : memref<8x1xf32, #tpu.memory_space<vmem>>, vector<8x1xf32>
      %41 = vector.shape_cast %40 : vector<8x1xf32> to vector<1x8x1xf32>
      %cst_19 = arith.constant dense<0.000000e+00> : vector<1xf32>
      %42 = vector.multi_reduction <add>, %41, %cst_19 [1, 2] : vector<1x8x1xf32> to vector<1xf32>
      %43 = vector.shape_cast %42 : vector<1xf32> to vector<1x1x1xf32>
      %44 = vector.extract %43[0, 0, 0] : f32 from vector<1x1x1xf32>
      %45 = vector.broadcast %44 : f32 to vector<8x128xf32>
      %46 = arith.addf %39, %45 : vector<8x128xf32>
      %c0_20 = arith.constant 0 : index
      %c0_21 = arith.constant 0 : index
      %47 = vector.load %arg4[%c0_20, %c0_21] : memref<8x128xf32, #tpu.memory_space<vmem>>, vector<8x128xf32>
      tpu.vector_store %arg4[%c0_20, %c0_21], %46 {strides = array<i32>} : memref<8x128xf32, #tpu.memory_space<vmem>>, vector<8x128xf32>,
    } else {
    }
    return
  }
  func.func @transform_0(%arg0: i32, %arg1: i32) -> (i32, i32) {
    %c1_i32 = arith.constant 1 : i32
    %0 = arith.muli %arg0, %c1_i32 : i32
    %1 = arith.addi %0, %arg1 : i32
    %c0_i32 = arith.constant 0 : i32
    %2 = arith.minsi %1, %c0_i32 : i32
    %c0_i32_0 = arith.constant 0 : i32
    %c0_i32_1 = arith.constant 0 : i32
    return %2, %c0_i32_0 : i32, i32
  }
  func.func @transform_1(%arg0: i32, %arg1: i32) -> (i32, i32) {
    %c1_i32 = arith.constant 1 : i32
    %0 = arith.muli %arg0, %c1_i32 : i32
    %1 = arith.addi %0, %arg1 : i32
    %c0_i32 = arith.constant 0 : i32
    %2 = arith.minsi %1, %c0_i32 : i32
    %c0_i32_0 = arith.constant 0 : i32
    %c0_i32_1 = arith.constant 0 : i32
    return %2, %c0_i32_0 : i32, i32
  }
  func.func @transform_2(%arg0: i32, %arg1: i32) -> (i32, i32) {
    %c0_i32 = arith.constant 0 : i32
    %c0_i32_0 = arith.constant 0 : i32
    return %arg0, %c0_i32 : i32, i32
  }
}

</mosaic_0001>

<llo_original>
// kernel: tpu_custom_call.1
$region0: #{tpu_custom_call.1}
  #allocation0 [shape = 'u32[]', space=smem, size = 0x4, offset = 0x4, fixed_abs, tag = 'smem constant byte address 0x4 - core index']
  #allocation1 [shape = 'u32[144,128]{1,0:T(1,128)}', space=vmem, size = 0x12000, scoped, tag = 'internal scratch']
  #allocation2 [shape = 'f32[8,1]{1,0:T(8,128)}', space=vmem, size = 0x1000, scoped, tag = 'scratch operand']
  %s0 = inlined_call_operand.hbm [shape: f32[8,32], index: 0, kind: input, shape index: {}]
  %s1 = inlined_call_operand.hbm [shape: f32[8,32], index: 1, kind: input, shape index: {}]
  %s2 = inlined_call_operand.hbm [shape: f32[8,128], index: 2, kind: output, shape index: {}]
  %s3 = sld [smem:[#allocation0]]
  $region34: #{tpu_custom_call.1} parent=0
    _
  %s5 = ssub.s32 1, %s3
  %s6 = scalar_select 0, %s5, %s3
  $region1: #{tpu_custom_call.1} parent=0
    #allocation3 [shape = 'u8[4096]{0}', space=vmem, size = 0x1000, scoped, tag = 'input window, operand 0, single buffered']
    #allocation4 [shape = 's32[1]{0}', space=sflag, size = 0x4, scoped, tag = 'scoped memory for tpu_custom_call.1']
    #allocation5 [shape = 's32[1]{0}', space=sflag, size = 0x4, scoped, tag = 'scoped memory for tpu_custom_call.1']
    #allocation6 [shape = 'u8[4096]{0}', space=vmem, size = 0x1000, scoped, tag = 'input window, operand 1, single buffered']
    #allocation7 [shape = 's32[1]{0}', space=sflag, size = 0x4, scoped, tag = 'scoped memory for tpu_custom_call.1']
    #allocation8 [shape = 'u8[4096]{0}', space=vmem, size = 0x1000, scoped, tag = 'output window, operand 0, single buffered']
    %7 = vsyncpa [#allocation4], 0
    %8 = vsyncpa [#allocation7], 0
    %9 = vsyncpa [#allocation5], 0
    // Predicated region
    $region2: #{tpu_custom_call.1} parent=1 // pred_check
      _
    $region3: #{tpu_custom_call.1} parent=1 // pred_check_branch
      %11 = sbr.rel (0) target = $region5
    $region4: #{tpu_custom_call.1} parent=1 // pred_region
      %s12 = sadd.s32 0, 0
      %p13 = scmp.lt.s32.totalorder %s12, 0
      %s14 = scalar_select %p13, %s12, 0
      %s16 = ssub.s32 128, 128
      %17 = vsyncadd [#allocation4], %s16
      %s18 = smul.addr %s14, 128
      %s19 = scalar_lea.hbm %s0, %s18
      %s21 = sshll.u32 [#allocation3], 4
      %s22 = int_to_ptr.vmem [resolvable:$true] %s21
      %24 = dma.hbm_to_vmem [thread:$0]  %s19, 128, %s22, [#allocation4]
    $region5: #{tpu_custom_call.1} parent=1 // pred_fallthru
      _
    // Predicated region
    $region6: #{tpu_custom_call.1} parent=1 // pred_check
      _
    $region7: #{tpu_custom_call.1} parent=1 // pred_check_branch
      %26 = sbr.rel (0) target = $region9
    $region8: #{tpu_custom_call.1} parent=1 // pred_region
      %s27 = sadd.s32 0, 0
      %p28 = scmp.lt.s32.totalorder %s27, 0
      %s29 = scalar_select %p28, %s27, 0
      %s31 = ssub.s32 128, 128
      %32 = vsyncadd [#allocation7], %s31
      %s33 = smul.addr %s29, 128
      %s34 = scalar_lea.hbm %s1, %s33
      %s36 = sshll.u32 [#allocation6], 4
      %s37 = int_to_ptr.vmem [resolvable:$true] %s36
      %39 = dma.hbm_to_vmem [thread:$0]  %s34, 128, %s37, [#allocation7]
    $region9: #{tpu_custom_call.1} parent=1 // pred_fallthru
      _
    // Predicated region
    $region10: #{tpu_custom_call.1} parent=1 // pred_check
      _
    $region11: #{tpu_custom_call.1} parent=1 // pred_check_branch
      %41 = sbr.rel (0) target = $region13
    $region12: #{tpu_custom_call.1} parent=1 // pred_region
      %42 = dma.done [#allocation4], 128
    $region13: #{tpu_custom_call.1} parent=1 // pred_fallthru
      _
    // Predicated region
    $region14: #{tpu_custom_call.1} parent=1 // pred_check
      _
    $region15: #{tpu_custom_call.1} parent=1 // pred_check_branch
      %44 = sbr.rel (0) target = $region17
    $region16: #{tpu_custom_call.1} parent=1 // pred_region
      %45 = dma.done [#allocation7], 128
    $region17: #{tpu_custom_call.1} parent=1 // pred_fallthru
      _
    %s46 = sadd.s32 0, 0
    %p47 = scmp.lt.s32.totalorder %s46, 0
    %s48 = scalar_select %p47, %s46, 0
    %s49 = sadd.s32 0, 0
    %p50 = scmp.lt.s32.totalorder %s49, 0
    %s51 = scalar_select %p50, %s49, 0
    %p52 = scmp.eq.s32.totalorder 0, 0
    // Predicated region
    $region18: #{tpu_custom_call.1} parent=1 // pred_check
      %p53 = pneg %p52
    $region19: #{tpu_custom_call.1} parent=1 // pred_check_branch
      %55 = sbr.rel (%p53) target = $region21
    $region20: #{tpu_custom_call.1} parent=1 // pred_region
      %vm56 = vcmask 7168
      %57 = vst.msk [vmem:[#allocation2] sm:$0xff] %vm56, 0.0
    $region21: #{tpu_custom_call.1} parent=1 // pred_fallthru
      _
    %v58 = vld [vmem:[#allocation3] sm:$0xff]
    %v59 = vmul.f32 %v58, 0.25
    %v60 = vld [vmem:[#allocation6] sm:$0xff]
    %v61 = vmul.f32 %v60, 0.25
    %vm62 = vcmask 261120
    %v63 = vsel %vm62, %v59, -inf
    %64 = vmax.xlane.f32.xlu0 %v63
    %v65 = vpop.xlane.xlu0 %64
    %v66 = vsub.f32 %v59, %v65
    %v67 = vmul.f32 %v66, 1.442695
    %v68 = vpow.pop %v67
    %v69 = vsel %vm62, %v68, 0.0
    %70 = vadd.xlane.f32.xlu0 %v69
    %v71 = vpop.xlane.xlu0 %70
    %v72 = vlog2.pop %v71
    %v73 = vmul.f32 %v72, 0.6931472
    %v74 = vsel %vm62, %v61, -inf
    %75 = vmax.xlane.f32.xlu0 %v74
    %v76 = vpop.xlane.xlu0 %75
    %v77 = vsub.f32 %v61, %v76
    %v78 = vmul.f32 %v77, 1.442695
    %v79 = vpow.pop %v78
    %v80 = vsel %vm62, %v79, 0.0
    %81 = vadd.xlane.f32.xlu0 %v80
    %v82 = vpop.xlane.xlu0 %81
    %v83 = vsub.f32 %v77, %v66
    %v84 = vmul.f32 %v79, %v83
    %v85 = vsel %vm62, %v84, 0.0
    %86 = vadd.xlane.f32.xlu0 %v85
    %v87 = vpop.xlane.xlu0 %86
    %v88 = vrcp.pop %v82
    %v89 = vmul.f32 %v87, %v88
    %v90 = vadd.f32 %v89, %v73
    %v91 = vlog2.pop %v82
    %v92 = vmul.f32 %v91, 0.6931472
    %v93 = vsub.f32 %v90, %v92
    %v94 = vld [vmem:[#allocation2] sm:$0xff]
    %v95 = vadd.f32 %v94, %v93
    %vm96 = vcmask 7168
    %97 = vst.msk [vmem:[#allocation2] sm:$0xff] %vm96, %v95
    // Predicated region
    $region22: #{tpu_custom_call.1} parent=1 // pred_check
      %p98 = pneg %p52
    $region23: #{tpu_custom_call.1} parent=1 // pred_check_branch
      %100 = sbr.rel (%p98) target = $region25
    $region24: #{tpu_custom_call.1} parent=1 // pred_region
      %v101 = vld [vmem:[#allocation2] sm:$0xff]
      %v102 = vsel %vm96, %v101, 0.0
      %103 = vadd.xlane.f32.xlu0 %v102
      %v104 = vpop.xlane.xlu0 %103
      %v105 = vrot.slane %v104, 4
      %v106 = vadd.f32 %v104, %v105
      %v107 = vrot.slane %v106, 2
      %v108 = vadd.f32 %v106, %v107
      %v109 = vrot.slane %v108, 1
      %v110 = vadd.f32 %v108, %v109
      %s111 = vtos %v110
      %v112 = vstv %s111
      %v113 = vadd.f32 %v112, 0.0
      %114 = vst [vmem:[#allocation8] sm:$0xff] %v113
    $region25: #{tpu_custom_call.1} parent=1 // pred_fallthru
      _
    // Predicated region
    $region26: #{tpu_custom_call.1} parent=1 // pred_check
      _
    $region27: #{tpu_custom_call.1} parent=1 // pred_check_branch
      %116 = sbr.rel (0) target = $region29
    $region28: #{tpu_custom_call.1} parent=1 // pred_region
      %s118 = ssub.s32 128, 128
      %119 = vsyncadd [#allocation5], %s118
      %s121 = sshll.u32 [#allocation8], 4
      %s122 = int_to_ptr.vmem [resolvable:$true] %s121
      %124 = dma.vmem_to_hbm [thread:$0]  %s122, 128, %s2, [#allocation5]
    $region29: #{tpu_custom_call.1} parent=1 // pred_fallthru
      _
    // Predicated region
    $region30: #{tpu_custom_call.1} parent=1 // pred_check
      _
    $region31: #{tpu_custom_call.1} parent=1 // pred_check_branch
      %126 = sbr.rel (0) target = $region33
    $region32: #{tpu_custom_call.1} parent=1 // pred_region
      %127 = dma.done [#allocation5], 128
    $region33: #{tpu_custom_call.1} parent=1 // pred_fallthru
      _
    %128 = vsyncpa [#allocation4], 1
    %129 = vsyncpa [#allocation7], 1
    %130 = vsyncpa [#allocation5], 1

</llo_original>
